<compile_context>
chip_gen: v6e
topology: v6e:2x2x1
jax: 0.10.0
libtpu: 0.0.40
codegen_flags: <defaults>
</compile_context>

<pallas_src>
import jax
import jax.numpy as jnp
from jax import lax
from jax.experimental import pallas as pl
from jax.experimental.pallas import tpu as pltpu
import numpy as np


def _length_regulator_kernel(cs_exc_ref, cs_inc_ref, x_ref, out_ref, mask_ref):
    # cs_exc_ref : (T, 1)  int32   exclusive cumsum of durations
    # cs_inc_ref : (T, 1)  int32   inclusive cumsum of durations
    # x_ref      : (C, T)  float
    # out_ref    : (C, TJ) float   one output-time tile
    # mask_ref   : (1, TJ) int32
    T = x_ref.shape[-1]
    TJ = out_ref.shape[-1]

    # Global output-frame indices covered by this tile.
    j0 = pl.program_id(1) * TJ
    j_idx = j0 + lax.broadcasted_iota(jnp.int32, (T, TJ), 1)      # (T, TJ)

    cs_exc = cs_exc_ref[...]                                      # (T, 1)
    cs_inc = cs_inc_ref[...]                                      # (T, 1)

    # Expansion matrix slice: m[t, j] = 1 iff output frame j copies input t.
    m = jnp.logical_and(j_idx >= cs_exc, j_idx < cs_inc).astype(x_ref.dtype)

    # out[c, j] = sum_t x[c, t] * m[t, j]  <=> repeat_interleave + zero pad.
    out = jnp.dot(x_ref[...], m, preferred_element_type=jnp.float32)  # (C, TJ)
    out_ref[...] = out.astype(out_ref.dtype)

    # Mask exactly as in the PyTorch module: not_equal(outputs, 0) on channel 0.
    mask_ref[...] = (out[0:1, :] != 0).astype(jnp.int32)


def _round_up(n, m):
    return ((n + m - 1) // m) * m


def length_regulator(x, duration):
    """x: [B, C, T] float; duration: [B, 1, T] int.

    Returns (outputs [B, C, new_time], new_mask [B, 1, new_time] int32).
    """
    B, C, T = x.shape
    assert duration.shape == (B, 1, T)

    dur = duration[:, 0, :].astype(jnp.int32)                 # (B, T)
    cs_inc = jnp.cumsum(dur, axis=-1)                         # inclusive cumsum
    cs_exc = cs_inc - dur                                     # exclusive cumsum
    lengths = cs_inc[:, -1]                                   # total duration per batch

    # new_time must be static; one host sync on the concrete durations.
    max_length = int(jax.device_get(jnp.max(lengths)))
    max_length = max(max_length, 1)

    # Lane-dense tiles: pad T_out to a multiple of the tile TJ (itself a
    # multiple of 128).  Padded tail is all zeros and sliced off afterwards.
    TJ = min(512, _round_up(max_length, 128))
    T_out_pad = _round_up(max_length, TJ)
    n_j = T_out_pad // TJ

    # Pass the cumsums pre-transposed as (B, T, 1) so the kernel can broadcast
    # them against the (T, TJ) index grid without any in-kernel transpose.
    cs_inc_in = cs_inc.reshape(B, T, 1)
    cs_exc_in = cs_exc.reshape(B, T, 1)

    out_shape = (
        jax.ShapeDtypeStruct((B, C, T_out_pad), x.dtype),
        jax.ShapeDtypeStruct((B, 1, T_out_pad), jnp.int32),
    )
    grid_spec = pltpu.PrefetchScalarGridSpec(
        num_scalar_prefetch=0,
        grid=(B, n_j),                                        # T_out axis innermost:
        in_specs=[                                            # x stays resident per batch item
            pl.BlockSpec((None, T, 1), lambda b, j: (b, 0, 0)),      # cs_exc
            pl.BlockSpec((None, T, 1), lambda b, j: (b, 0, 0)),      # cs_inc
            pl.BlockSpec((None, C, T), lambda b, j: (b, 0, 0)),      # x
        ],
        out_specs=[
            pl.BlockSpec((None, C, TJ), lambda b, j: (b, 0, j)),     # outputs
            pl.BlockSpec((None, 1, TJ), lambda b, j: (b, 0, j)),     # mask
        ],
    )
    outputs, new_mask = pl.pallas_call(
        _length_regulator_kernel,
        out_shape=out_shape,
        grid_spec=grid_spec,
        compiler_params=pltpu.CompilerParams(
            dimension_semantics=("parallel", "parallel"),
            vmem_limit_bytes=64 * 1024 * 1024,
        ),
    )(cs_exc_in, cs_inc_in, x)

    # Strip the 128-alignment padding so the returned shape matches the
    # PyTorch semantics exactly.
    if T_out_pad != max_length:
        outputs = outputs[:, :, :max_length]
        new_mask = new_mask[:, :, :max_length]
    return outputs, new_mask


if __name__ == "__main__":
    key = jax.random.PRNGKey(0)
    kx, kd = jax.random.split(key)
    B, C, T = 2, 8, 16
    x = jax.random.normal(kx, (B, C, T), dtype=jnp.float32)
    duration = jax.random.randint(kd, (B, 1, T), 0, 4, dtype=jnp.int32)  # masked durations incl. 0

    outputs, new_mask = length_regulator(x, duration)
    jax.block_until_ready((outputs, new_mask))

    # Pure-numpy reference: repeat_interleave per batch + zero pad + mask from channel 0.
    xn = np.asarray(x)
    dn = np.asarray(duration)
    lens = dn[:, 0, :].sum(-1)
    L = int(lens.max())
    ref = np.zeros((B, C, L), dtype=xn.dtype)
    for b in range(B):
        rep = np.repeat(xn[b], dn[b, 0], axis=-1)
        ref[b, :, : rep.shape[-1]] = rep
    ref_mask = (ref[:, 0:1, :] != 0).astype(np.int32)

    np.testing.assert_allclose(np.asarray(outputs), ref, rtol=1e-5, atol=1e-5)
    np.testing.assert_array_equal(np.asarray(new_mask), ref_mask)
    print("KERNEL_OK")
</pallas_src>

<mosaic_0001>
module attributes {stable_mosaic.version = 11 : i64} {
  func.func @_length_regulator_kernel(%arg0: i32, %arg1: i32, %arg2: memref<1x16x1xi32, #tpu.memory_space<vmem>>, %arg3: memref<1x16x1xi32, #tpu.memory_space<vmem>>, %arg4: memref<1x8x16xf32, #tpu.memory_space<vmem>>, %arg5: memref<1x8x128xf32, #tpu.memory_space<vmem>>, %arg6: memref<1x1x128xi32, #tpu.memory_space<vmem>>) attributes {dimension_semantics = [#tpu.dimension_semantics<parallel>, #tpu.dimension_semantics<parallel>], iteration_bounds = array<i64: 2, 1>, scalar_prefetch = 0 : i64, scratch_operands = 0 : i64, tpu.core_type = #tpu.core_type<tc>, window_params = [{transform_indices = @transform_0, window_bounds = array<i64: 1, 16, 1>}, {transform_indices = @transform_1, window_bounds = array<i64: 1, 16, 1>}, {transform_indices = @transform_2, window_bounds = array<i64: 1, 8, 16>}, {transform_indices = @transform_3, window_bounds = array<i64: 1, 8, 128>}, {transform_indices = @transform_4, window_bounds = array<i64: 1, 1, 128>}]} {
    %c128_i32 = arith.constant 128 : i32
    %0 = arith.muli %arg1, %c128_i32 : i32
    %1 = tpu.iota {dimensions = array<i32: 1>} : vector<16x128xi32>
    %2 = vector.broadcast %0 : i32 to vector<16x128xi32>
    %3 = arith.addi %2, %1 : vector<16x128xi32>
    %c0 = arith.constant 0 : index
    %c0_0 = arith.constant 0 : index
    %c0_1 = arith.constant 0 : index
    %4 = vector.load %arg2[%c0, %c0_0, %c0_1] : memref<1x16x1xi32, #tpu.memory_space<vmem>>, vector<1x16x1xi32>
    %5 = vector.shape_cast %4 : vector<1x16x1xi32> to vector<16x1xi32>
    %c0_2 = arith.constant 0 : index
    %c0_3 = arith.constant 0 : index
    %c0_4 = arith.constant 0 : index
    %6 = vector.load %arg3[%c0_2, %c0_3, %c0_4] : memref<1x16x1xi32, #tpu.memory_space<vmem>>, vector<1x16x1xi32>
    %7 = vector.shape_cast %6 : vector<1x16x1xi32> to vector<16x1xi32>
    %8 = vector.broadcast %5 : vector<16x1xi32> to vector<16x128xi32>
    %9 = arith.cmpi sge, %3, %8 : vector<16x128xi32>
    %10 = vector.broadcast %7 : vector<16x1xi32> to vector<16x128xi32>
    %11 = arith.cmpi slt, %3, %10 : vector<16x128xi32>
    %12 = arith.andi %9, %11 : vector<16x128xi1>
    %13 = arith.extui %12 : vector<16x128xi1> to vector<16x128xi32>
    %14 = arith.sitofp %13 : vector<16x128xi32> to vector<16x128xf32>
    %c0_5 = arith.constant 0 : index
    %c0_6 = arith.constant 0 : index
    %c0_7 = arith.constant 0 : index
    %15 = vector.load %arg4[%c0_5, %c0_6, %c0_7] : memref<1x8x16xf32, #tpu.memory_space<vmem>>, vector<1x8x16xf32>
    %16 = vector.shape_cast %15 : vector<1x8x16xf32> to vector<8x16xf32>
    %cst = arith.constant dense<0.000000e+00> : vector<8x128xf32>
    %17 = tpu.matmul %16, %14, %cst {dimension_numbers = #tpu.dot_dimension_numbers<[1], [0], [0], [1], [0, 0, 1, 1], [], []>} : vector<8x16xf32>, vector<16x128xf32>, vector<8x128xf32> -> vector<8x128xf32>
    %c0_8 = arith.constant 0 : index
    %c0_9 = arith.constant 0 : index
    %c0_10 = arith.constant 0 : index
    %18 = vector.load %arg5[%c0_8, %c0_9, %c0_10] : memref<1x8x128xf32, #tpu.memory_space<vmem>>, vector<1x8x128xf32>
    %19 = vector.shape_cast %18 : vector<1x8x128xf32> to vector<8x128xf32>
    %20 = vector.shape_cast %17 : vector<8x128xf32> to vector<1x8x128xf32>
    tpu.vector_store %arg5[%c0_8, %c0_9, %c0_10], %20 {strides = array<i32>} : memref<1x8x128xf32, #tpu.memory_space<vmem>>, vector<1x8x128xf32>,
    %21 = vector.extract_strided_slice %17 {offsets = [0, 0], sizes = [1, 128], strides = [1, 1]} : vector<8x128xf32> to vector<1x128xf32>
    %cst_11 = arith.constant 0.000000e+00 : f32
    %22 = vector.broadcast %cst_11 : f32 to vector<1x128xf32>
    %23 = arith.cmpf one, %21, %22 : vector<1x128xf32>
    %24 = arith.extui %23 : vector<1x128xi1> to vector<1x128xi32>
    %c0_12 = arith.constant 0 : index
    %c0_13 = arith.constant 0 : index
    %c0_14 = arith.constant 0 : index
    %25 = vector.load %arg6[%c0_12, %c0_13, %c0_14] : memref<1x1x128xi32, #tpu.memory_space<vmem>>, vector<1x1x128xi32>
    %26 = vector.shape_cast %25 : vector<1x1x128xi32> to vector<1x128xi32>
    %27 = vector.shape_cast %24 : vector<1x128xi32> to vector<1x1x128xi32>
    tpu.vector_store %arg6[%c0_12, %c0_13, %c0_14], %27 {strides = array<i32>} : memref<1x1x128xi32, #tpu.memory_space<vmem>>, vector<1x1x128xi32>,
    return
  }
  func.func @transform_0(%arg0: i32, %arg1: i32) -> (i32, i32, i32) {
    %c0_i32 = arith.constant 0 : i32
    %c0_i32_0 = arith.constant 0 : i32
    %c0_i32_1 = arith.constant 0 : i32
    return %arg0, %c0_i32, %c0_i32_0 : i32, i32, i32
  }
  func.func @transform_1(%arg0: i32, %arg1: i32) -> (i32, i32, i32) {
    %c0_i32 = arith.constant 0 : i32
    %c0_i32_0 = arith.constant 0 : i32
    %c0_i32_1 = arith.constant 0 : i32
    return %arg0, %c0_i32, %c0_i32_0 : i32, i32, i32
  }
  func.func @transform_2(%arg0: i32, %arg1: i32) -> (i32, i32, i32) {
    %c0_i32 = arith.constant 0 : i32
    %c0_i32_0 = arith.constant 0 : i32
    %c0_i32_1 = arith.constant 0 : i32
    return %arg0, %c0_i32, %c0_i32_0 : i32, i32, i32
  }
  func.func @transform_3(%arg0: i32, %arg1: i32) -> (i32, i32, i32) {
    %c0_i32 = arith.constant 0 : i32
    %c0_i32_0 = arith.constant 0 : i32
    return %arg0, %c0_i32, %arg1 : i32, i32, i32
  }
  func.func @transform_4(%arg0: i32, %arg1: i32) -> (i32, i32, i32) {
    %c0_i32 = arith.constant 0 : i32
    %c0_i32_0 = arith.constant 0 : i32
    return %arg0, %c0_i32, %arg1 : i32, i32, i32
  }
}

</mosaic_0001>

<llo_original>
// kernel: tpu_custom_call.1
$region0: #{tpu_custom_call.1}
  #allocation0 [shape = 'u32[]', space=smem, size = 0x4, offset = 0x4, fixed_abs, tag = 'smem constant byte address 0x4 - core index']
  #allocation1 [shape = 'u32[144,128]{1,0:T(1,128)}', space=vmem, size = 0x12000, scoped, tag = 'internal scratch']
  %s0 = inlined_call_operand.vmem [shape: s32[2,16,1], index: 0, kind: input, shape index: {}]
  %s1 = inlined_call_operand.vmem [shape: s32[2,16,1], index: 1, kind: input, shape index: {}]
  %s2 = inlined_call_operand.vmem [shape: f32[2,8,16], index: 2, kind: input, shape index: {}]
  %s3 = inlined_call_operand.hbm [shape: f32[2,8,128], index: 3, kind: output, shape index: {0}]
  %s4 = inlined_call_operand.hbm [shape: s32[2,1,128], index: 4, kind: output, shape index: {1}]
  %5 = xla_tuple %s3, %s4
  %s6 = sld [smem:[#allocation0]]
  $region53: #{tpu_custom_call.1} parent=0
    _
  %s8 = ssub.s32 1, %s6
  %s9 = scalar_select 0, %s8, %s6
  $region1: #{tpu_custom_call.1} parent=0
    #allocation2 [shape = 'u8[8192]{0}', space=vmem, size = 0x2000, scoped, tag = 'output window, operand 0']
    #allocation3 [shape = 's32[2]{0}', space=sflag, size = 0x8, scoped, tag = 'scoped memory for tpu_custom_call.1']
    #allocation4 [shape = 'u8[1024]{0}', space=vmem, size = 0x400, scoped, tag = 'output window, operand 1']
    #allocation5 [shape = 's32[2]{0}', space=sflag, size = 0x8, scoped, tag = 'scoped memory for tpu_custom_call.1']
    %10 = vsyncpa [#allocation3], 0
    %s11 = scalar_lea.sflag [#allocation3], 1
    %12 = vsyncpa %s11, 0
    %13 = vsyncpa [#allocation5], 0
    %s14 = scalar_lea.sflag [#allocation5], 1
    %15 = vsyncpa %s14, 0
    loop: start=0, step=1, limit=4
    $region2: #{tpu_custom_call.1} parent=1 // loop_pre_header
      _
    $region3: #{tpu_custom_call.1} parent=1 // loop_header
      %s17 = sphi 0, %s21
      %p18 = scmp.ge.s32.totalorder %s17, 4
      %s24 = sphi 0, %s36
      %s25 = sphi 0, %s32
      %s26 = sphi 0, %s24
      %s27 = sphi 0, %s25
      %s28 = sphi 0, %s26
      %s29 = sphi 0, %s27
      %s39 = sphi 0, %s41
      %s42 = sphi 0, %s39
      %s43 = sphi 0, %s42
      %s59 = sphi 0, %s43
      %s65 = sphi 0, %s67
      %s68 = sphi 0, %s65
      %s69 = sphi 0, %s68
      %s85 = sphi 0, %s69
      %s91 = sphi 0, %s93
      %s94 = sphi 0, %s91
      %s95 = sphi 0, %s94
      %s111 = sphi 0, %s95
      %s119 = sphi 0, %s121
      %s122 = sphi 0, %s119
      %s123 = sphi 0, %s122
      %s139 = sphi 0, %s123
      %s147 = sphi 0, %s149
      %s150 = sphi 0, %s147
      %s151 = sphi 0, %s150
      %s167 = sphi 0, %s151
    $region4: #{tpu_custom_call.1} parent=1 // loop_header_branch
      %20 = sbr.rel (%p18) target = $region8
    $region5: #{tpu_custom_call.1} parent=1 // loop_body
      %s22 = ssub.s32 %s17, 1
      %s23 = ssub.s32 %s17, 2
      %s30 = sadd.s32 1, %s25
      %p31 = scmp.ge.s32.totalorder %s30, 1
      %s32 = scalar_select %p31, 0, %s30
      %s33 = sadd.s32 1, %s24
      %s34 = scalar_select %p31, %s33, %s24
      %p35 = scmp.ge.s32.totalorder %s34, 2
      %s36 = scalar_select %p35, 0, %s34
      %s37 = ssub.s32 %s24, %s36
      %p38 = scmp.eq.s32.totalorder %s37, 0
      %s40 = sadd.s32 %s39, 1
      %s41 = scalar_select %p38, %s39, %s40
      %p44 = pneg %p38
      %p45 = scmp.eq.s32.totalorder %s17, 1
      %p46 = por %p44, %p45
      %p47 = scmp.ne.s32.totalorder %s39, %s42
      %p48 = scmp.eq.s32.totalorder %s17, 0
      %p49 = por %p47, %p48
      %p50 = scmp.ne.s32.totalorder %s39, %s42
      %p51 = scmp.eq.s32.totalorder %s22, 1
      %p52 = por %p50, %p51
      %p53 = scmp.ne.s32.totalorder %s42, %s43
      %p54 = scmp.eq.s32.totalorder %s22, 0
      %p55 = por %p53, %p54
      %p56 = scmp.ne.s32.totalorder %s42, %s43
      %p57 = scmp.eq.s32.totalorder %s23, 1
      %p58 = por %p56, %p57
      %p60 = scmp.ne.s32.totalorder %s43, %s59
      %p61 = scmp.eq.s32.totalorder %s23, 0
      %p62 = por %p60, %p61
      %s63 = ssub.s32 %s24, %s36
      %p64 = scmp.eq.s32.totalorder %s63, 0
      %s66 = sadd.s32 %s65, 1
      %s67 = scalar_select %p64, %s65, %s66
      %p70 = pneg %p64
      %p71 = scmp.eq.s32.totalorder %s17, 1
      %p72 = por %p70, %p71
      %p73 = scmp.ne.s32.totalorder %s65, %s68
      %p74 = scmp.eq.s32.totalorder %s17, 0
      %p75 = por %p73, %p74
      %p76 = scmp.ne.s32.totalorder %s65, %s68
      %p77 = scmp.eq.s32.totalorder %s22, 1
      %p78 = por %p76, %p77
      %p79 = scmp.ne.s32.totalorder %s68, %s69
      %p80 = scmp.eq.s32.totalorder %s22, 0
      %p81 = por %p79, %p80
      %p82 = scmp.ne.s32.totalorder %s68, %s69
      %p83 = scmp.eq.s32.totalorder %s23, 1
      %p84 = por %p82, %p83
      %p86 = scmp.ne.s32.totalorder %s69, %s85
      %p87 = scmp.eq.s32.totalorder %s23, 0
      %p88 = por %p86, %p87
      %s89 = ssub.s32 %s24, %s36
      %p90 = scmp.eq.s32.totalorder %s89, 0
      %s92 = sadd.s32 %s91, 1
      %s93 = scalar_select %p90, %s91, %s92
      %p96 = pneg %p90
      %p97 = scmp.eq.s32.totalorder %s17, 1
      %p98 = por %p96, %p97
      %p99 = scmp.ne.s32.totalorder %s91, %s94
      %p100 = scmp.eq.s32.totalorder %s17, 0
      %p101 = por %p99, %p100
      %p102 = scmp.ne.s32.totalorder %s91, %s94
      %p103 = scmp.eq.s32.totalorder %s22, 1
      %p104 = por %p102, %p103
      %p105 = scmp.ne.s32.totalorder %s94, %s95
      %p106 = scmp.eq.s32.totalorder %s22, 0
      %p107 = por %p105, %p106
      %p108 = scmp.ne.s32.totalorder %s94, %s95
      %p109 = scmp.eq.s32.totalorder %s23, 1
      %p110 = por %p108, %p109
      %p112 = scmp.ne.s32.totalorder %s95, %s111
      %p113 = scmp.eq.s32.totalorder %s23, 0
      %p114 = por %p112, %p113
      %s115 = ssub.s32 %s24, %s36
      %s116 = ssub.s32 %s25, %s32
      %s117 = sor.u32 %s115, %s116
      %p118 = scmp.eq.s32.totalorder %s117, 0
      %s120 = sadd.s32 %s119, 1
      %s121 = scalar_select %p118, %s119, %s120
      %p124 = pneg %p118
      %p125 = scmp.eq.s32.totalorder %s17, 1
      %p126 = por %p124, %p125
      %p127 = scmp.ne.s32.totalorder %s119, %s122
      %p128 = scmp.eq.s32.totalorder %s17, 0
      %p129 = por %p127, %p128
      %p130 = scmp.ne.s32.totalorder %s119, %s122
      %p131 = scmp.eq.s32.totalorder %s22, 1
      %p132 = por %p130, %p131
      %p133 = scmp.ne.s32.totalorder %s122, %s123
      %p134 = scmp.eq.s32.totalorder %s22, 0
      %p135 = por %p133, %p134
      %p136 = scmp.ne.s32.totalorder %s122, %s123
      %p137 = scmp.eq.s32.totalorder %s23, 1
      %p138 = por %p136, %p137
      %p140 = scmp.ne.s32.totalorder %s123, %s139
      %p141 = scmp.eq.s32.totalorder %s23, 0
      %p142 = por %p140, %p141
      %s143 = ssub.s32 %s24, %s36
      %s144 = ssub.s32 %s25, %s32
      %s145 = sor.u32 %s143, %s144
      %p146 = scmp.eq.s32.totalorder %s145, 0
      %s148 = sadd.s32 %s147, 1
      %s149 = scalar_select %p146, %s147, %s148
      %p152 = pneg %p146
      %p153 = scmp.eq.s32.totalorder %s17, 1
      %p154 = por %p152, %p153
      %p155 = scmp.ne.s32.totalorder %s147, %s150
      %p156 = scmp.eq.s32.totalorder %s17, 0
      %p157 = por %p155, %p156
      %p158 = scmp.ne.s32.totalorder %s147, %s150
      %p159 = scmp.eq.s32.totalorder %s22, 1
      %p160 = por %p158, %p159
      %p161 = scmp.ne.s32.totalorder %s150, %s151
      %p162 = scmp.eq.s32.totalorder %s22, 0
      %p163 = por %p161, %p162
      %p164 = scmp.ne.s32.totalorder %s150, %s151
      %p165 = scmp.eq.s32.totalorder %s23, 1
      %p166 = por %p164, %p165
      %p168 = scmp.ne.s32.totalorder %s151, %s167
      %p169 = scmp.eq.s32.totalorder %s23, 0
      %p170 = por %p168, %p169
      %p171 = scmp.le.s32.totalorder 1, %s17
      %p172 = scmp.lt.s32.totalorder %s17, 3
      %p173 = pnand %p171, %p172
      %p174 = pneg %p173
      // Predicated region
      $region9: #{tpu_custom_call.1} parent=5 // pred_check
        _
      $region10: #{tpu_custom_call.1} parent=5 // pred_check_branch
        %176 = sbr.rel (%p173) target = $region12
      $region11: #{tpu_custom_call.1} parent=5 // pred_region
        %s177 = ssub.s32 %s17, 1
      $region12: #{tpu_custom_call.1} parent=5 // pred_fallthru
        _
      %p178 = scmp.lt.s32.totalorder %s17, 2
      // Predicated region
      $region13: #{tpu_custom_call.1} parent=5 // pred_check
        %p179 = pneg %p178
      $region14: #{tpu_custom_call.1} parent=5 // pred_check_branch
        %181 = sbr.rel (%p179) target = $region16
      $region15: #{tpu_custom_call.1} parent=5 // pred_region
        // Predicated region
        $region17: #{tpu_custom_call.1} parent=15 // pred_check
          %p182 = pneg %p49
        $region18: #{tpu_custom_call.1} parent=15 // pred_check_branch
          %184 = sbr.rel (%p182) target = $region20
        $region19: #{tpu_custom_call.1} parent=15 // pred_region
          %p185 = scmp.lt.s32.totalorder %s24, 1
          %s186 = scalar_select %p185, %s24, 1
          %s187 = smul.addr %s186, 2
          %s188 = smul.addr %s187, 8
          %s189 = scalar_lea.vmem %s0, %s188
        $region20: #{tpu_custom_call.1} parent=15 // pred_fallthru
          _
        // Predicated region
        $region21: #{tpu_custom_call.1} parent=15 // pred_check
          %p190 = pneg %p75
        $region22: #{tpu_custom_call.1} parent=15 // pred_check_branch
          %192 = sbr.rel (%p190) target = $region24
        $region23: #{tpu_custom_call.1} parent=15 // pred_region
          %p193 = scmp.lt.s32.totalorder %s24, 1
          %s194 = scalar_select %p193, %s24, 1
          %s195 = smul.addr %s194, 2
          %s196 = smul.addr %s195, 8
          %s197 = scalar_lea.vmem %s1, %s196
        $region24: #{tpu_custom_call.1} parent=15 // pred_fallthru
          _
        // Predicated region
        $region25: #{tpu_custom_call.1} parent=15 // pred_check
          %p198 = pneg %p101
        $region26: #{tpu_custom_call.1} parent=15 // pred_check_branch
          %200 = sbr.rel (%p198) target = $region28
        $region27: #{tpu_custom_call.1} parent=15 // pred_region
          %p201 = scmp.lt.s32.totalorder %s24, 1
          %s202 = scalar_select %p201, %s24, 1
          %s203 = smul.addr %s202, 8
          %s204 = scalar_lea.vmem %s2, %s203
        $region28: #{tpu_custom_call.1} parent=15 // pred_fallthru
          _
      $region16: #{tpu_custom_call.1} parent=5 // pred_fallthru
        _
      %p205 = scmp.le.s32.totalorder 1, %s17
      %p206 = scmp.lt.s32.totalorder %s17, 3
      %p207 = pnand %p205, %p206
      %p208 = pneg %p207
      // Predicated region
      $region29: #{tpu_custom_call.1} parent=5 // pred_check
        _
      $region30: #{tpu_custom_call.1} parent=5 // pred_check_branch
        %210 = sbr.rel (%p207) target = $region32
      $region31: #{tpu_custom_call.1} parent=5 // pred_region
        %s211 = ssub.s32 %s17, 1
        %p212 = scmp.lt.s32.totalorder %s26, 1
        %s213 = scalar_select %p212, %s26, 1
        %s214 = smul.addr %s213, 2
        %s215 = smul.addr %s214, 8
        %s216 = scalar_lea.vmem %s0, %s215
        %p217 = pneg %p55
        %p218 = pneg %p52
        %p219 = scmp.lt.s32.totalorder %s26, 1
        %s220 = scalar_select %p219, %s26, 1
        %s221 = smul.addr %s220, 2
        %s222 = smul.addr %s221, 8
        %s223 = scalar_lea.vmem %s1, %s222
        %p224 = pneg %p81
        %p225 = pneg %p78
        %p226 = scmp.lt.s32.totalorder %s26, 1
        %s227 = scalar_select %p226, %s26, 1
        %s228 = smul.addr %s227, 8
        %s229 = scalar_lea.vmem %s2, %s228
        %p230 = pneg %p107
        %p231 = pneg %p104
        %p232 = pneg %p135
        %p233 = pneg %p132
        %s234 = sand.u32 %s122, 1
        %s235 = scalar_lea.sflag [#allocation3], %s234
        %s236 = sand.u32 %s122, 1
        %s237 = smul.addr %s236, 8
        %s238 = scalar_lea.vmem [#allocation2], %s237
        %p239 = pneg %p163
        %p240 = pneg %p160
        %s241 = sand.u32 %s150, 1
        %s242 = scalar_lea.sflag [#allocation5], %s241
        %s243 = sand.u32 %s150, 1
        %s244 = scalar_lea.vmem [#allocation4], %s243
        %p245 = scmp.lt.s32.totalorder %s26, 1
        %s246 = scalar_select %p245, %s26, 1
        %s247 = smul.addr %s246, 2
        %s248 = smul.addr %s247, 8
        %s249 = scalar_lea.vmem %s0, %s248
        %p250 = scmp.lt.s32.totalorder %s26, 1
        %s251 = scalar_select %p250, %s26, 1
        %s252 = smul.addr %s251, 2
        %s253 = smul.addr %s252, 8
        %s254 = scalar_lea.vmem %s1, %s253
        %p255 = scmp.lt.s32.totalorder %s26, 1
        %s256 = scalar_select %p255, %s26, 1
        %s257 = smul.addr %s256, 8
        %s258 = scalar_lea.vmem %s2, %s257
        %s259 = smul.u32 %s27, 128
        %v260 = vlaneseq
        %v261 = vand.u32 %v260, 127
        %v262 = vstv %s259
        %v263 = vadd.s32 %v262, %v261
        %v264 = vld [vmem:[%s249] sm:$0xff]
        %v265 = vld [vmem:[%s249 + $0x8] sm:$0xff]
        %v266 = vld [vmem:[%s254] sm:$0xff]
        %v267 = vld [vmem:[%s254 + $0x8] sm:$0xff]
        %268 = vset.pattern.permute.xlu0 0
        %269 = vperm.xlu0 %268, %v264
        %v270 = vpop.permute.xlu0 %269
        %271 = vset.pattern.permute.xlu0 0
        %272 = vperm.xlu0 %271, %v265
        %v273 = vpop.permute.xlu0 %272
        %vm274 = vcmp.ge.s32.totalorder %v263, %v270
        %vm275 = vcmp.ge.s32.totalorder %v263, %v273
        %276 = vset.pattern.permute.xlu0 0
        %277 = vperm.xlu0 %276, %v266
        %v278 = vpop.permute.xlu0 %277
        %279 = vset.pattern.permute.xlu0 0
        %280 = vperm.xlu0 %279, %v267
        %v281 = vpop.permute.xlu0 %280
        %vm282 = vcmp.lt.s32.totalorder %v263, %v278
        %vm283 = vcmp.lt.s32.totalorder %v263, %v281
        %vm284 = vmand %vm274, %vm282
        %vm285 = vmand %vm275, %vm283
        %v286 = vsel %vm284, 1, 0
        %v287 = vsel %vm285, 1, 0
        %v288 = vcvt.s32.f32 %v286
        %v289 = vcvt.s32.f32 %v287
        %v290 = vld [vmem:[%s258] sm:$0xff]
        %vm291 = vcmask 130048
        %v293 = vsel %vm291, %v290, 0
        %295 = vmatprep.subr.mxu0 0.0
        %296 = vmatpush1.msra.mxu0 0.0
        %297 = vmatprep.subr.mxu0 0.0
        %298 = vmatpush1.msra.mxu0 0.0
        %299 = vmatprep.subr.mxu0 0.0
        %300 = vmatpush1.msra.mxu0 0.0
        %301 = vmatprep.subr.mxu0 0.0
        %302 = vmatpush1.msra.mxu0 0.0
        %303 = vmatprep.subr.mxu0 0.0
        %304 = vmatpush1.msra.mxu0 0.0
        %305 = vmatprep.subr.mxu0 0.0
        %306 = vmatpush1.msra.mxu0 0.0
        %307 = vmatprep.subr.mxu0 0.0
        %308 = vmatpush1.msra.mxu0 0.0
        %309 = vmatprep.subr.mxu0 0.0
        %310 = vmatpush1.msra.mxu0 0.0
        %311 = vmatprep.subr.mxu0 0.0
        %312 = vmatpush1.msra.mxu0 0.0
        %313 = vmatprep.subr.mxu0 0.0
        %314 = vmatpush1.msra.mxu0 0.0
        %315 = vmatprep.subr.mxu0 0.0
        %316 = vmatpush1.msra.mxu0 0.0
        %317 = vmatprep.subr.mxu0 0.0
        %318 = vmatpush1.msra.mxu0 0.0
        %319 = vmatprep.subr.mxu0 0.0
        %320 = vmatpush1.msra.mxu0 0.0
        %321 = vmatprep.subr.mxu0 0.0
        %322 = vmatpush1.msra.mxu0 0.0
        %323 = vmatprep.subr.mxu0 0.0
        %324 = vmatpush1.msra.mxu0 %v289
        %325 = vmatprep.subr.mxu0 0.0
        %326 = vmatpush1.msra.mxu0 %v288
        %327 = vmatprep.subr.mxu0 0.0
        %328 = vmatpush2.msra.mxu0 0.0
        %329 = vmatprep.subr.mxu0 0.0
        %330 = vmatpush2.msra.mxu0 0.0
        %331 = vmatprep.subr.mxu0 0.0
        %332 = vmatpush2.msra.mxu0 0.0
        %333 = vmatprep.subr.mxu0 0.0
        %334 = vmatpush2.msra.mxu0 0.0
        %335 = vmatprep.subr.mxu0 0.0
        %336 = vmatpush2.msra.mxu0 0.0
        %337 = vmatprep.subr.mxu0 0.0
        %338 = vmatpush2.msra.mxu0 0.0
        %339 = vmatprep.subr.mxu0 0.0
        %340 = vmatpush2.msra.mxu0 0.0
        %341 = vmatprep.subr.mxu0 0.0
        %342 = vmatpush2.msra.mxu0 0.0
        %343 = vmatprep.subr.mxu0 0.0
        %344 = vmatpush2.msra.mxu0 0.0
        %345 = vmatprep.subr.mxu0 0.0
        %346 = vmatpush2.msra.mxu0 0.0
        %347 = vmatprep.subr.mxu0 0.0
        %348 = vmatpush2.msra.mxu0 0.0
        %349 = vmatprep.subr.mxu0 0.0
        %350 = vmatpush2.msra.mxu0 0.0
        %351 = vmatprep.subr.mxu0 0.0
        %352 = vmatpush2.msra.mxu0 0.0
        %353 = vmatprep.subr.mxu0 0.0
        %354 = vmatpush2.msra.mxu0 0.0
        %355 = vmatprep.subr.mxu0 0.0
        %356 = vmatpush2.msra.mxu0 0.0
        %357 = vmatprep.subr.mxu0 0.0
        %358 = vmatpush2.msra.mxu0 0.0
        %359 = vmatprep.mubr.f32.mxu0 0.0
        %360 = vmatmul.mubr.f32.gmra.mxu0 %v293
        %v361 = vpop.f32.mrf.mxu0
        %v362 = vadd.f32 0.0, %v361
        %v363 = vpop.f32.mrf.mxu0
        %364 = vdwg.mxu0
        %365 = vst [vmem:[%s238] sm:$0xff] %v362
        %vm366 = vcmp.ne.f32.partialorder %v362, 0.0
        %v367 = vsel %vm366, 1, 0
        %368 = vst [vmem:[%s244] sm:$0x1] %v367
        %s369 = sand.u32 %s122, 1
        %s370 = scalar_lea.sflag [#allocation3], %s369
        %s371 = sand.u32 %s122, 1
        %s372 = smul.addr %s371, 8
        %s373 = scalar_lea.vmem [#allocation2], %s372
        %s374 = sand.u32 %s150, 1
        %s375 = scalar_lea.sflag [#allocation5], %s374
        %s376 = sand.u32 %s150, 1
        %s377 = scalar_lea.vmem [#allocation4], %s376
        // Predicated region
        $region33: #{tpu_custom_call.1} parent=31 // pred_check
          %p378 = pneg %p132
        $region34: #{tpu_custom_call.1} parent=31 // pred_check_branch
          %380 = sbr.rel (%p378) target = $region36
        $region35: #{tpu_custom_call.1} parent=31 // pred_region
          %s382 = ssub.s32 128, 128
          %383 = vsyncadd %s370, %s382
          %s384 = sadd.s32 %s27, %s26
          %s385 = smul.addr %s384, 128
          %s386 = scalar_lea.hbm %s3, %s385
          %s388 = sshll.u32 %s373, 4
          %s389 = int_to_ptr.vmem [resolvable:$true] %s388
          %391 = dma.vmem_to_hbm [thread:$0]  %s389, 128, %s386, %s370
        $region36: #{tpu_custom_call.1} parent=31 // pred_fallthru
          _
        // Predicated region
        $region37: #{tpu_custom_call.1} parent=31 // pred_check
          %p392 = pneg %p160
        $region38: #{tpu_custom_call.1} parent=31 // pred_check_branch
          %394 = sbr.rel (%p392) target = $region40
        $region39: #{tpu_custom_call.1} parent=31 // pred_region
          %s396 = ssub.s32 16, 16
          %397 = vsyncadd %s375, %s396
          %s398 = sadd.s32 %s27, %s26
          %s399 = smul.addr %s398, 16
          %s400 = scalar_lea.hbm %s4, %s399
          %s402 = sshll.u32 %s377, 4
          %s403 = int_to_ptr.vmem [resolvable:$true] %s402
          %405 = dma.vmem_to_hbm [thread:$0]  %s403, 16, %s400, %s375
        $region40: #{tpu_custom_call.1} parent=31 // pred_fallthru
          _
      $region32: #{tpu_custom_call.1} parent=5 // pred_fallthru
        _
      %p406 = scmp.le.s32.totalorder 2, %s17
      // Predicated region
      $region41: #{tpu_custom_call.1} parent=5 // pred_check
        %p407 = pneg %p406
      $region42: #{tpu_custom_call.1} parent=5 // pred_check_branch
        %409 = sbr.rel (%p407) target = $region44
      $region43: #{tpu_custom_call.1} parent=5 // pred_region
        %s410 = ssub.s32 %s17, 2
        // Predicated region
        $region45: #{tpu_custom_call.1} parent=43 // pred_check
          %p411 = pneg %p138
        $region46: #{tpu_custom_call.1} parent=43 // pred_check_branch
          %413 = sbr.rel (%p411) target = $region48
        $region47: #{tpu_custom_call.1} parent=43 // pred_region
          %s414 = sand.u32 %s123, 1
          %s415 = scalar_lea.sflag [#allocation3], %s414
          %s416 = sand.u32 %s123, 1
          %s417 = smul.addr %s416, 8
          %s418 = scalar_lea.vmem [#allocation2], %s417
          %419 = dma.done %s415, 128
        $region48: #{tpu_custom_call.1} parent=43 // pred_fallthru
          _
        // Predicated region
        $region49: #{tpu_custom_call.1} parent=43 // pred_check
          %p420 = pneg %p166
        $region50: #{tpu_custom_call.1} parent=43 // pred_check_branch
          %422 = sbr.rel (%p420) target = $region52
        $region51: #{tpu_custom_call.1} parent=43 // pred_region
          %s423 = sand.u32 %s151, 1
          %s424 = scalar_lea.sflag [#allocation5], %s423
          %s425 = sand.u32 %s151, 1
          %s426 = scalar_lea.vmem [#allocation4], %s425
          %427 = dma.done %s424, 16
        $region52: #{tpu_custom_call.1} parent=43 // pred_fallthru
          _
      $region44: #{tpu_custom_call.1} parent=5 // pred_fallthru
        _
    $region6: #{tpu_custom_call.1} parent=1 // loop_footer
      %s21 = sadd.s32 1, %s17
    $region7: #{tpu_custom_call.1} parent=1 // loop_footer_branch
      %16 = sbr.rel target = $region3
    $region8: #{tpu_custom_call.1} parent=1 // loop_exit
      _
    %428 = vsyncpa [#allocation3], 1
    %s429 = scalar_lea.sflag [#allocation3], 1
    %430 = vsyncpa %s429, 1
    %431 = vsyncpa [#allocation5], 1
    %s432 = scalar_lea.sflag [#allocation5], 1
    %433 = vsyncpa %s432, 1

</llo_original>
